<compile_context>
chip_gen: v7x
topology: tpu7x:2x2x1
jax: 0.10.0
libtpu: 0.0.40
codegen_flags: <defaults>
</compile_context>

<pallas_src>
import math

import jax
import jax.numpy as jnp
import numpy as np
from jax.experimental import pallas as pl
from jax.experimental.pallas import tpu as pltpu


# ---------------------------------------------------------------------------
# Kernel: elementwise fusion over lane-dense [rows, cols] tiles
# ---------------------------------------------------------------------------
def _make_fuse_kernel(compute_f32):
    def kernel(ac_ref, hs_ref, hc_ref, o_ref):
        hs = hs_ref[...]                          # (TB, TC)
        hc = hc_ref[...]                          # (TB, TC)
        if compute_f32:
            hs = hs.astype(jnp.float32)
            hc = hc.astype(jnp.float32)
            a = ac_ref[:, 0:1]                    # (TB, 1) f32
            c = ac_ref[:, 1:2]                    # (TB, 1) f32
        else:
            # Native low-precision math (bf16 VPU on v6e/v7x): halves VALU ops
            # and vreg pressure, keeps the kernel HBM-bound.
            a = ac_ref[:, 0:1].astype(hs.dtype)
            c = ac_ref[:, 1:2].astype(hs.dtype)
        fused = hc + a * (hs - hc) + c * (hs * hc)
        o_ref[...] = fused.astype(o_ref.dtype)
    return kernel


# ---------------------------------------------------------------------------
# Tile / layout helpers
# ---------------------------------------------------------------------------
def _tpu_generation():
    try:
        kind = jax.devices()[0].device_kind.lower()
    except Exception:
        return 6
    for g in (7, 6, 5, 4, 3, 2):
        if f"v{g}" in kind:
            return g
    return 6


def _fold_factor(B, LD, sub):
    """S s.t. reshaping (B, LD)->(B*S, LD/S) gives sublane-dense row blocks."""
    if LD % 128 == 0 and B % sub != 0:
        k = sub // math.gcd(sub, B)      # smallest S making (B*S) % sub == 0
        units = LD // 128
        for s in (k, 2 * k, 4 * k):
            if s >= 1 and units % s == 0:
                return s
    return 1


def _choose_tiles(rows, cols, itemsize, sub, target_bytes):
    """Pick (tb, tc) obeying the (8,128) block rule, ~target_bytes per block."""
    # Lane tile: largest multiple of 128 that DIVIDES cols (no ragged j block).
    if cols % 128 == 0:
        per_row_elems = max(128, target_bytes // (sub * itemsize))
        units = cols // 128
        best = 1
        d = 1
        while d * d <= units:
            if units % d == 0:
                for cand in (d, units // d):
                    if cand * 128 <= per_row_elems:
                        best = max(best, cand)
            d += 1
        tc = 128 * best
    else:
        tc = cols                        # full row == array dim (allowed)

    # Row tile: full rows if small, otherwise a bounded multiple of `sub`.
    if rows <= sub:
        tb = rows                        # == full array dim (allowed)
    else:
        want = max(sub, target_bytes // (tc * itemsize))
        tb = sub * max(1, want // sub)
        tb = min(tb, (rows // sub) * sub)
    return tb, tc


# ---------------------------------------------------------------------------
# Wrapper
# ---------------------------------------------------------------------------
def dynamic_scale_selection(wavelet_energies, h_s, h_c, params, pred_len):
    """wavelet_energies: [B, num_scales]; h_s, h_c: [B, L, D]."""
    B, L, D = h_s.shape
    ns = params["alpha_params"].shape[0]
    LD = L * D
    out_dtype = h_s.dtype
    itemsize = jnp.dtype(out_dtype).itemsize
    gen = _tpu_generation()

    # --- fusion weights (tiny): plain XLA, matches the PyTorch head ---------
    alpha_p = jnp.abs(params["alpha_params"].astype(jnp.float32)) + 1e-5   # (ns,)
    beta_p = params["beta_params"].astype(jnp.float32)                     # (ns,)
    sw = 1.0 / (1.0 + jnp.exp(-(jnp.float32(pred_len) - beta_p) / alpha_p))
    sw_b = jnp.broadcast_to(sw[None, :], (B, ns))
    combined = jnp.concatenate(
        [sw_b, wavelet_energies.astype(jnp.float32)], axis=1)              # (B, 2ns)
    logits = (combined @ params["fusion_weight"].astype(jnp.float32).T
              + params["fusion_bias"].astype(jnp.float32))                 # (B, 2)
    fw = jax.nn.softmax(logits, axis=1)                                    # (B, 2)
    ac = jnp.stack(
        [fw[:, 0],
         fw[:, 1] * params["interaction_param"].astype(jnp.float32)],
        axis=1)                                                            # (B, 2) f32

    # --- lane-dense, sublane-aware flatten of the hot-path operands ---------
    sub = max(8, 32 // itemsize)                 # padded sublanes: 8 f32 / 16 bf16
    S = _fold_factor(B, LD, sub)
    rows, cols = B * S, LD // S
    hs2 = h_s.reshape(rows, cols)                # free reshape (row-major)
    hc2 = h_c.reshape(rows, cols)
    ac2 = jnp.repeat(ac, S, axis=0) if S > 1 else ac

    compute_f32 = not (gen >= 6 and out_dtype == jnp.bfloat16)
    target_bytes = (4 << 20) if gen >= 7 else (1 << 20)
    tb, tc = _choose_tiles(rows, cols, itemsize, sub, target_bytes)

    if gen >= 7:
        # Guarantee >= 2 parallel blocks so both v7x TensorCores get work.
        gi = -(-rows // tb)
        gj = -(-cols // tc)
        if gi * gj < 2 and tc % 256 == 0:
            tc //= 2

    grid = (-(-rows // tb), -(-cols // tc))      # LD innermost: scalar block stays put

    # VMEM budget: 3 streamed arrays x 2 buffers x block (+ tiny ac + slack).
    block_bytes = tb * tc * itemsize
    need = 6 * block_bytes + (4 << 20)
    vmem_cap = (56 << 20) if gen >= 7 else (100 << 20)
    vmem_limit = int(min(max(need, 32 << 20), vmem_cap))

    fused2 = pl.pallas_call(
        _make_fuse_kernel(compute_f32),
        out_shape=jax.ShapeDtypeStruct((rows, cols), out_dtype),
        grid=grid,
        in_specs=[
            pl.BlockSpec((tb, 2), lambda i, j: (i, 0)),     # merged per-row scalars
            pl.BlockSpec((tb, tc), lambda i, j: (i, j)),    # h_s
            pl.BlockSpec((tb, tc), lambda i, j: (i, j)),    # h_c
        ],
        out_specs=pl.BlockSpec((tb, tc), lambda i, j: (i, j)),
        compiler_params=pltpu.CompilerParams(
            dimension_semantics=("parallel", "parallel"),
            vmem_limit_bytes=vmem_limit),
        cost_estimate=pl.CostEstimate(
            flops=6 * B * LD,
            bytes_accessed=3 * B * LD * itemsize + B * 2 * 4,
            transcendentals=0),
    )(ac2, hs2, hc2)

    return fused2.reshape(B, L, D)


# ---------------------------------------------------------------------------
# Pure-JAX reference (mirrors the PyTorch forward exactly, f32)
# ---------------------------------------------------------------------------
def reference(wavelet_energies, h_s, h_c, params, pred_len):
    ns = params["alpha_params"].shape[0]
    alpha = jnp.abs(params["alpha_params"]) + 1e-5
    beta = params["beta_params"]
    sw = 1.0 / (1.0 + jnp.exp(-(pred_len - beta) / alpha))        # (ns,)
    sw = jnp.broadcast_to(sw[None, :], (h_s.shape[0], ns))
    combined = jnp.concatenate([sw, wavelet_energies], axis=1)    # (B, 2*ns)
    logits = combined @ params["fusion_weight"].T + params["fusion_bias"]
    fw = jax.nn.softmax(logits, axis=1)
    a = fw[:, 0][:, None, None]
    b = fw[:, 1][:, None, None]
    interaction = params["interaction_param"] * (h_s * h_c)
    return a * h_s + (1 - a) * h_c + b * interaction


if __name__ == "__main__":
    pred_len = 24
    num_scales = 4

    key = jax.random.PRNGKey(0)
    k_w, k_b = jax.random.split(key, 2)

    in_feat = 2 * num_scales
    bound = 1.0 / np.sqrt(in_feat)
    params = {
        "alpha_params": jnp.ones((num_scales,), jnp.float32),
        "beta_params": jnp.ones((num_scales,), jnp.float32) * pred_len / 2.0,
        "fusion_weight": jax.random.uniform(k_w, (2, in_feat), jnp.float32,
                                            -bound, bound),
        "fusion_bias": jax.random.uniform(k_b, (2,), jnp.float32,
                                          -bound, bound),
        "interaction_param": jnp.asarray(0.2, jnp.float32),
    }

    def run_case(B, L, D, dtype, rtol, atol, seed):
        kk = jax.random.split(jax.random.PRNGKey(seed), 3)
        wav = jax.random.uniform(kk[0], (B, num_scales), jnp.float32)
        hs = jax.random.normal(kk[1], (B, L, D), jnp.float32)
        hc = jax.random.normal(kk[2], (B, L, D), jnp.float32)
        out = dynamic_scale_selection(wav, hs.astype(dtype), hc.astype(dtype),
                                      params, pred_len)
        out = jax.block_until_ready(out)
        ref = jax.block_until_ready(reference(wav, hs, hc, params, pred_len))
        np.testing.assert_allclose(np.asarray(out, dtype=np.float32),
                                   np.asarray(ref), rtol=rtol, atol=atol)

    # Main small case, module-consistent shapes (f32 path).
    run_case(2, 8, 32, jnp.float32, 1e-5, 1e-5, 1)
    # Non-128-multiple LD and odd batch (full-row fallback path).
    run_case(3, 7, 24, jnp.float32, 1e-5, 1e-5, 2)
    # bf16 path: exercises sublane folding and native bf16 math on v6e/v7x.
    run_case(2, 16, 256, jnp.bfloat16, 5e-2, 1e-1, 3)

    print("KERNEL_OK")
</pallas_src>

<mosaic_0001>
module attributes {stable_mosaic.version = 11 : i64} {
  func.func @kernel(%arg0: i32, %arg1: i32, %arg2: memref<2x2xf32, #tpu.memory_space<vmem>>, %arg3: memref<2x256xf32, #tpu.memory_space<vmem>>, %arg4: memref<2x256xf32, #tpu.memory_space<vmem>>, %arg5: memref<2x256xf32, #tpu.memory_space<vmem>>) attributes {dimension_semantics = [#tpu.dimension_semantics<parallel>, #tpu.dimension_semantics<parallel>], iteration_bounds = array<i64: 1, 1>, scalar_prefetch = 0 : i64, scratch_operands = 0 : i64, tpu.core_type = #tpu.core_type<tc>, window_params = [{transform_indices = @transform_0, window_bounds = array<i64: 2, 2>}, {transform_indices = @transform_1, window_bounds = array<i64: 2, 256>}, {transform_indices = @transform_2, window_bounds = array<i64: 2, 256>}, {transform_indices = @transform_3, window_bounds = array<i64: 2, 256>}]} {
    %c0 = arith.constant 0 : index
    %c0_0 = arith.constant 0 : index
    %0 = vector.load %arg3[%c0, %c0_0] : memref<2x256xf32, #tpu.memory_space<vmem>>, vector<2x256xf32>
    %c0_1 = arith.constant 0 : index
    %c0_2 = arith.constant 0 : index
    %1 = vector.load %arg4[%c0_1, %c0_2] : memref<2x256xf32, #tpu.memory_space<vmem>>, vector<2x256xf32>
    %c0_3 = arith.constant 0 : index
    %c0_4 = arith.constant 0 : index
    %2 = vector.load %arg2[%c0_3, %c0_4] : memref<2x2xf32, #tpu.memory_space<vmem>>, vector<2x1xf32>
    %c0_5 = arith.constant 0 : index
    %c1 = arith.constant 1 : index
    %3 = vector.load %arg2[%c0_5, %c1] : memref<2x2xf32, #tpu.memory_space<vmem>>, vector<2x1xf32>
    %4 = arith.subf %0, %1 : vector<2x256xf32>
    %5 = vector.broadcast %2 : vector<2x1xf32> to vector<2x256xf32>
    %6 = arith.mulf %5, %4 : vector<2x256xf32>
    %7 = arith.addf %1, %6 : vector<2x256xf32>
    %8 = arith.mulf %0, %1 : vector<2x256xf32>
    %9 = vector.broadcast %3 : vector<2x1xf32> to vector<2x256xf32>
    %10 = arith.mulf %9, %8 : vector<2x256xf32>
    %11 = arith.addf %7, %10 : vector<2x256xf32>
    %c0_6 = arith.constant 0 : index
    %c0_7 = arith.constant 0 : index
    %12 = vector.load %arg5[%c0_6, %c0_7] : memref<2x256xf32, #tpu.memory_space<vmem>>, vector<2x256xf32>
    tpu.vector_store %arg5[%c0_6, %c0_7], %11 {strides = array<i32>} : memref<2x256xf32, #tpu.memory_space<vmem>>, vector<2x256xf32>,
    return
  }
  func.func @transform_0(%arg0: i32, %arg1: i32) -> (i32, i32) {
    %c0_i32 = arith.constant 0 : i32
    %c0_i32_0 = arith.constant 0 : i32
    return %arg0, %c0_i32 : i32, i32
  }
  func.func @transform_1(%arg0: i32, %arg1: i32) -> (i32, i32) {
    %c0_i32 = arith.constant 0 : i32
    return %arg0, %arg1 : i32, i32
  }
  func.func @transform_2(%arg0: i32, %arg1: i32) -> (i32, i32) {
    %c0_i32 = arith.constant 0 : i32
    return %arg0, %arg1 : i32, i32
  }
  func.func @transform_3(%arg0: i32, %arg1: i32) -> (i32, i32) {
    %c0_i32 = arith.constant 0 : i32
    return %arg0, %arg1 : i32, i32
  }
}

</mosaic_0001>

<llo_original>
// kernel: tpu_custom_call.1
$region0: #{tpu_custom_call.1}
  #allocation0 [shape = 'u32[]', space=smem, size = 0x4, offset = 0x4, fixed_abs, tag = 'smem constant byte address 0x4 - core index']
  #allocation1 [shape = 'u32[144,128]{1,0:T(1,128)}', space=vmem, size = 0x12000, scoped, tag = 'internal scratch']
  %s0 = inlined_call_operand.hbm [shape: f32[2,2], index: 0, kind: input, shape index: {}]
  %s1 = inlined_call_operand.hbm [shape: f32[2,256], index: 1, kind: input, shape index: {}]
  %s2 = inlined_call_operand.vmem [shape: f32[2,256], index: 2, kind: input, shape index: {}]
  %s3 = inlined_call_operand.hbm [shape: f32[2,256], index: 3, kind: output, shape index: {}]
  %s4 = sld [smem:[#allocation0]]
  $region30: #{tpu_custom_call.1} parent=0
    _
  %s6 = ssub.s32 1, %s4
  %s7 = scalar_select 0, %s6, %s4
  $region1: #{tpu_custom_call.1} parent=0
    #allocation2 [shape = 'u8[1024]{0}', space=vmem, size = 0x400, scoped, tag = 'input window, operand 0, single buffered']
    #allocation3 [shape = 's32[1]{0}', space=sflag, size = 0x4, scoped, tag = 'scoped memory for tpu_custom_call.1']
    #allocation4 [shape = 's32[1]{0}', space=sflag, size = 0x4, scoped, tag = 'scoped memory for tpu_custom_call.1']
    #allocation5 [shape = 'u8[2048]{0}', space=vmem, size = 0x800, scoped, tag = 'input window, operand 1, single buffered']
    #allocation6 [shape = 's32[1]{0}', space=sflag, size = 0x4, scoped, tag = 'scoped memory for tpu_custom_call.1']
    #allocation7 [shape = 'u8[2048]{0}', space=vmem, size = 0x800, scoped, tag = 'output window, operand 0, single buffered']
    %8 = vsyncpa [#allocation3], 0
    %9 = vsyncpa [#allocation6], 0
    %10 = vsyncpa [#allocation4], 0
    // Predicated region
    $region2: #{tpu_custom_call.1} parent=1 // pred_check
      _
    $region3: #{tpu_custom_call.1} parent=1 // pred_check_branch
      %12 = sbr.rel (0) target = $region5
    $region4: #{tpu_custom_call.1} parent=1 // pred_region
      %s14 = ssub.s32 32, 32
      %15 = vsyncadd [#allocation3], %s14
      %s17 = sshll.u32 [#allocation2], 4
      %s18 = int_to_ptr.vmem [resolvable:$true] %s17
      %20 = dma.hbm_to_vmem [thread:$0]  %s0, 32, %s18, [#allocation3]
    $region5: #{tpu_custom_call.1} parent=1 // pred_fallthru
      _
    // Predicated region
    $region6: #{tpu_custom_call.1} parent=1 // pred_check
      _
    $region7: #{tpu_custom_call.1} parent=1 // pred_check_branch
      %22 = sbr.rel (0) target = $region9
    $region8: #{tpu_custom_call.1} parent=1 // pred_region
      %s24 = ssub.s32 64, 64
      %25 = vsyncadd [#allocation6], %s24
      %s27 = sshll.u32 [#allocation5], 4
      %s28 = int_to_ptr.vmem [resolvable:$true] %s27
      %30 = dma.hbm_to_vmem [thread:$0]  %s1, 64, %s28, [#allocation6]
    $region9: #{tpu_custom_call.1} parent=1 // pred_fallthru
      _
    // Predicated region
    $region10: #{tpu_custom_call.1} parent=1 // pred_check
      _
    $region11: #{tpu_custom_call.1} parent=1 // pred_check_branch
      %32 = sbr.rel (0) target = $region13
    $region12: #{tpu_custom_call.1} parent=1 // pred_region
      _
    $region13: #{tpu_custom_call.1} parent=1 // pred_fallthru
      _
    // Predicated region
    $region14: #{tpu_custom_call.1} parent=1 // pred_check
      _
    $region15: #{tpu_custom_call.1} parent=1 // pred_check_branch
      %34 = sbr.rel (0) target = $region17
    $region16: #{tpu_custom_call.1} parent=1 // pred_region
      %35 = dma.done [#allocation3], 32
    $region17: #{tpu_custom_call.1} parent=1 // pred_fallthru
      _
    // Predicated region
    $region18: #{tpu_custom_call.1} parent=1 // pred_check
      _
    $region19: #{tpu_custom_call.1} parent=1 // pred_check_branch
      %37 = sbr.rel (0) target = $region21
    $region20: #{tpu_custom_call.1} parent=1 // pred_region
      %38 = dma.done [#allocation6], 64
    $region21: #{tpu_custom_call.1} parent=1 // pred_fallthru
      _
    %v39 = vld [vmem:[#allocation5] sm:$0xf]
    %v40 = vld [vmem:[%s2] sm:$0xf]
    %v41 = vld [vmem:[#allocation2] sm:$0x3]
    %v42 = vsub.f32 %v39, %v40
    %44 = vset.pattern.permute.xlu0 0
    %45 = vperm.xlu0 %44, %v41
    %v46 = vpop.permute.xlu0 %45
    %v50 = vunpack.c.l.s4 1983009808
    %v51 = vunpack.c.0.s8 %v50
    %v52 = vlaneseq
    %v53 = vshrl.u32 %v52, 7
    %v54 = vsub.s32 %v51, %v53
    %v55 = vrot.slane %v42, %v54
    %v56 = vcombine.high %v55, %v55
    %v59 = vmul.f32 %v46, %v55
    %v60 = vmul.f32 %v46, %v56
    %v63 = vcombine.low %v59, %v60
    %v65 = vunpack.c.l.s4 1983009808
    %v66 = vunpack.c.0.s8 %v65
    %v67 = vlaneseq
    %v68 = vshrl.u32 %v67, 7
    %v69 = vsub.s32 %v66, %v68
    %v70 = vrot.slane %v63, %v69
    %v72 = vadd.f32 %v40, %v70
    %v73 = vmul.f32 %v39, %v40
    %74 = vset.pattern.permute.xlu0 1
    %75 = vperm.xlu0 %74, %v41
    %v76 = vpop.permute.xlu0 %75
    %v80 = vunpack.c.l.s4 1983009808
    %v81 = vunpack.c.0.s8 %v80
    %v82 = vlaneseq
    %v83 = vshrl.u32 %v82, 7
    %v84 = vsub.s32 %v81, %v83
    %v85 = vrot.slane %v73, %v84
    %v86 = vcombine.high %v85, %v85
    %v89 = vmul.f32 %v76, %v85
    %v90 = vmul.f32 %v76, %v86
    %v93 = vcombine.low %v89, %v90
    %v95 = vunpack.c.l.s4 1983009808
    %v96 = vunpack.c.0.s8 %v95
    %v97 = vlaneseq
    %v98 = vshrl.u32 %v97, 7
    %v99 = vsub.s32 %v96, %v98
    %v100 = vrot.slane %v93, %v99
    %v102 = vadd.f32 %v72, %v100
    %103 = vst [vmem:[#allocation7] sm:$0xf] %v102
    // Predicated region
    $region22: #{tpu_custom_call.1} parent=1 // pred_check
      _
    $region23: #{tpu_custom_call.1} parent=1 // pred_check_branch
      %105 = sbr.rel (0) target = $region25
    $region24: #{tpu_custom_call.1} parent=1 // pred_region
      %s107 = ssub.s32 64, 64
      %108 = vsyncadd [#allocation4], %s107
      %s110 = sshll.u32 [#allocation7], 4
      %s111 = int_to_ptr.vmem [resolvable:$true] %s110
      %113 = dma.vmem_to_hbm [thread:$0]  %s111, 64, %s3, [#allocation4]
    $region25: #{tpu_custom_call.1} parent=1 // pred_fallthru
      _
    // Predicated region
    $region26: #{tpu_custom_call.1} parent=1 // pred_check
      _
    $region27: #{tpu_custom_call.1} parent=1 // pred_check_branch
      %115 = sbr.rel (0) target = $region29
    $region28: #{tpu_custom_call.1} parent=1 // pred_region
      %116 = dma.done [#allocation4], 64
    $region29: #{tpu_custom_call.1} parent=1 // pred_fallthru
      _
    %117 = vsyncpa [#allocation3], 1
    %118 = vsyncpa [#allocation6], 1
    %119 = vsyncpa [#allocation4], 1

</llo_original>
